<compile_context>
chip_gen: v6e
topology: v6e:2x2x1
jax: 0.10.0
libtpu: 0.0.40
codegen_flags: <defaults>
</compile_context>

<pallas_src>
import jax
import jax.numpy as jnp
from jax.experimental import pallas as pl
from jax.experimental.pallas import tpu as pltpu

BOARD_ROWS = 6
BOARD_COLS = 7
IN_DIM = BOARD_ROWS * BOARD_COLS   # 42
HID = 64
OUT_DIM = BOARD_COLS               # 7
OUT_PAD = 128                      # lane-dense output width (multiple of 128)


def _round_up(x, m):
    return ((x + m - 1) // m) * m


def policy_kernel(x_ref, w1_ref, b1_ref, w23_ref, b23_ref, out_ref):
    """softmax(relu(x@W1 + b1) @ W23 + b23) for one (BM, .) batch tile."""
    # affine1 + ReLU (f32 accumulation regardless of input/weight dtype)
    h = jnp.dot(x_ref[...], w1_ref[...], preferred_element_type=jnp.float32)
    h = jnp.maximum(h + b1_ref[...], 0.0)                         # (BM, 64) f32

    # fused affine2+affine3 -> padded logits; padded columns carry -1e30 bias
    logits = jnp.dot(h.astype(w23_ref.dtype), w23_ref[...],
                     preferred_element_type=jnp.float32)
    logits = logits + b23_ref[...]                                # (BM, 128) f32

    # numerically stable softmax; padded columns exp() to exactly 0
    m = jnp.max(logits, axis=-1, keepdims=True)
    e = jnp.exp(logits - m)
    denom = jnp.sum(e, axis=-1, keepdims=True)
    # EUP approximate reciprocal + one Newton refinement: divide stays off the
    # VALU, accuracy stays at f32 divide level.
    inv = pl.reciprocal(denom, approx=True)
    inv = inv * (2.0 - denom * inv)
    out_ref[...] = (e * inv).astype(out_ref.dtype)


def policy_forward(x, params, *, block_rows=2048, compute_dtype=jnp.float32):
    """x: (B, 42). params: w1 (42,64), b1 (1,64), w2 (64,64), b2 (1,64),
    w3 (64,7), b3 (1,7) stored as (in, out). Returns (B, 7) f32 probabilities."""
    B = x.shape[0]

    # ---- fold affine2 into affine3 (no activation between them) ------------
    w23 = params["w2"] @ params["w3"]                        # (64, 7)
    b23 = params["b2"] @ params["w3"] + params["b3"]         # (1, 7)

    # ---- pad output width to 128 lanes; masked columns get -1e30 bias ------
    w23p = jnp.zeros((HID, OUT_PAD), jnp.float32).at[:, :OUT_DIM].set(w23)
    b23p = jnp.full((1, OUT_PAD), -1e30, jnp.float32).at[:, :OUT_DIM].set(b23)

    # ---- batch tiling (sublane-aligned block, pad last tile) ----------------
    bm = min(block_rows, _round_up(B, 8))
    b_pad = _round_up(B, bm)
    xp = x if b_pad == B else jnp.pad(x, ((0, b_pad - B), (0, 0)))

    # inputs/weights in compute dtype (f32 or bf16); biases + epilogue in f32
    xp = xp.astype(compute_dtype)
    w1 = params["w1"].astype(compute_dtype)
    b1 = params["b1"].astype(jnp.float32)
    w23p = w23p.astype(compute_dtype)

    grid = (b_pad // bm,)
    itemsize = jnp.dtype(compute_dtype).itemsize
    cost = pl.CostEstimate(
        flops=int(2 * b_pad * (IN_DIM * HID + HID * OUT_PAD)),
        transcendentals=int(b_pad * OUT_PAD),
        bytes_accessed=int(b_pad * IN_DIM * itemsize
                           + b_pad * OUT_PAD * 4
                           + (IN_DIM * HID + HID * OUT_PAD) * itemsize
                           + (HID + OUT_PAD) * 4),
    )

    out = pl.pallas_call(
        policy_kernel,
        out_shape=jax.ShapeDtypeStruct((b_pad, OUT_PAD), jnp.float32),
        grid_spec=pltpu.PrefetchScalarGridSpec(
            num_scalar_prefetch=0,
            grid=grid,
            in_specs=[
                pl.BlockSpec((bm, IN_DIM), lambda i: (i, 0)),    # x tile (pipelined)
                pl.BlockSpec((IN_DIM, HID), lambda i: (0, 0)),   # w1   (resident)
                pl.BlockSpec((1, HID), lambda i: (0, 0)),        # b1   (resident)
                pl.BlockSpec((HID, OUT_PAD), lambda i: (0, 0)),  # w23  (resident)
                pl.BlockSpec((1, OUT_PAD), lambda i: (0, 0)),    # b23  (resident)
            ],
            out_specs=pl.BlockSpec((bm, OUT_PAD), lambda i: (i, 0)),
        ),
        compiler_params=pltpu.CompilerParams(
            dimension_semantics=("parallel",),          # megacore-shard batch (v7x)
            vmem_limit_bytes=32 * 1024 * 1024,          # safe on v5e/v6e/v7x
        ),
        cost_estimate=cost,
    )(xp, w1, b1, w23p, b23p)

    return out[:B, :OUT_DIM]


def init_params(key):
    """Deterministic init mimicking torch.nn.Linear default U[-1/sqrt(fan_in), +]."""
    def linear(key, fan_in, fan_out):
        kw, kb = jax.random.split(key)
        bound = 1.0 / jnp.sqrt(fan_in)
        w = jax.random.uniform(kw, (fan_in, fan_out), jnp.float32, -bound, bound)
        b = jax.random.uniform(kb, (1, fan_out), jnp.float32, -bound, bound)
        return w, b

    k1, k2, k3 = jax.random.split(key, 3)
    w1, b1 = linear(k1, IN_DIM, HID)
    w2, b2 = linear(k2, HID, HID)
    w3, b3 = linear(k3, HID, OUT_DIM)
    return {"w1": w1, "b1": b1, "w2": w2, "b2": b2, "w3": w3, "b3": b3}


def reference_forward(x, p):
    """Un-fused pure-JAX reference matching the original PyTorch forward."""
    h = jnp.maximum(x @ p["w1"] + p["b1"], 0.0)
    h = h @ p["w2"] + p["b2"]
    logits = h @ p["w3"] + p["b3"]
    return jax.nn.softmax(logits, axis=-1)


if __name__ == "__main__":
    key = jax.random.PRNGKey(0)
    kx, kp = jax.random.split(key)

    batch = 2
    x = jax.random.uniform(kx, (batch, IN_DIM), jnp.float32, -1.0, 1.0)
    params = init_params(kp)
    ref = reference_forward(x, params)

    # f32 path (tight correctness check vs un-fused reference)
    out = jax.block_until_ready(policy_forward(x, params))
    assert out.shape == (batch, OUT_DIM)
    assert jnp.allclose(out, ref, atol=1e-5, rtol=1e-5), "mismatch vs reference (f32)"
    assert jnp.allclose(jnp.sum(out, axis=-1), 1.0, atol=1e-4), "rows must sum to 1"

    # larger batch exercising the grid / padding path (grid > 1, ragged last tile)
    kb = jax.random.fold_in(kx, 1)
    xb = jax.random.uniform(kb, (2500, IN_DIM), jnp.float32, -1.0, 1.0)
    out_big = jax.block_until_ready(policy_forward(xb, params, block_rows=1024))
    ref_big = reference_forward(xb, params)
    assert out_big.shape == (2500, OUT_DIM)
    assert jnp.allclose(out_big, ref_big, atol=1e-5, rtol=1e-5), "mismatch (tiled f32)"

    # bf16 fast path (v6e/v7x): same math, MXU-native dtype, looser tolerance
    out_bf16 = jax.block_until_ready(
        policy_forward(x, params, compute_dtype=jnp.bfloat16))
    assert jnp.allclose(out_bf16, ref, atol=5e-2, rtol=5e-2), "mismatch (bf16)"

    print("KERNEL_OK")
</pallas_src>

<mosaic_0001>
module attributes {stable_mosaic.version = 11 : i64} {
  func.func @policy_kernel(%arg0: i32, %arg1: memref<8x42xf32, #tpu.memory_space<vmem>>, %arg2: memref<42x64xf32, #tpu.memory_space<vmem>>, %arg3: memref<1x64xf32, #tpu.memory_space<vmem>>, %arg4: memref<64x128xf32, #tpu.memory_space<vmem>>, %arg5: memref<1x128xf32, #tpu.memory_space<vmem>>, %arg6: memref<8x128xf32, #tpu.memory_space<vmem>>) attributes {dimension_semantics = [#tpu.dimension_semantics<parallel>], iteration_bounds = array<i64: 1>, scalar_prefetch = 0 : i64, scratch_operands = 0 : i64, tpu.core_type = #tpu.core_type<tc>, window_params = [{transform_indices = @transform_0, window_bounds = array<i64: 8, 42>}, {pipeline_mode = #tpu.pipeline_mode<synchronous>, transform_indices = @transform_1, window_bounds = array<i64: 42, 64>}, {pipeline_mode = #tpu.pipeline_mode<synchronous>, transform_indices = @transform_2, window_bounds = array<i64: 1, 64>}, {pipeline_mode = #tpu.pipeline_mode<synchronous>, transform_indices = @transform_3, window_bounds = array<i64: 64, 128>}, {pipeline_mode = #tpu.pipeline_mode<synchronous>, transform_indices = @transform_4, window_bounds = array<i64: 1, 128>}, {transform_indices = @transform_5, window_bounds = array<i64: 8, 128>}]} {
    %c0 = arith.constant 0 : index
    %c0_0 = arith.constant 0 : index
    %0 = vector.load %arg1[%c0, %c0_0] : memref<8x42xf32, #tpu.memory_space<vmem>>, vector<8x42xf32>
    %c0_1 = arith.constant 0 : index
    %c0_2 = arith.constant 0 : index
    %1 = vector.load %arg2[%c0_1, %c0_2] : memref<42x64xf32, #tpu.memory_space<vmem>>, vector<42x64xf32>
    %cst = arith.constant dense<0.000000e+00> : vector<8x64xf32>
    %2 = tpu.matmul %0, %1, %cst {dimension_numbers = #tpu.dot_dimension_numbers<[1], [0], [0], [1], [0, 0, 1, 1], [], []>} : vector<8x42xf32>, vector<42x64xf32>, vector<8x64xf32> -> vector<8x64xf32>
    %c0_3 = arith.constant 0 : index
    %c0_4 = arith.constant 0 : index
    %3 = vector.load %arg3[%c0_3, %c0_4] : memref<1x64xf32, #tpu.memory_space<vmem>>, vector<1x64xf32>
    %4 = vector.broadcast %3 : vector<1x64xf32> to vector<8x64xf32>
    %5 = arith.addf %2, %4 : vector<8x64xf32>
    %cst_5 = arith.constant 0.000000e+00 : f32
    %6 = vector.broadcast %cst_5 : f32 to vector<8x64xf32>
    %7 = arith.maximumf %5, %6 : vector<8x64xf32>
    %c0_6 = arith.constant 0 : index
    %c0_7 = arith.constant 0 : index
    %8 = vector.load %arg4[%c0_6, %c0_7] : memref<64x128xf32, #tpu.memory_space<vmem>>, vector<64x128xf32>
    %cst_8 = arith.constant dense<0.000000e+00> : vector<8x128xf32>
    %9 = tpu.matmul %7, %8, %cst_8 {dimension_numbers = #tpu.dot_dimension_numbers<[1], [0], [0], [1], [0, 0, 1, 1], [], []>} : vector<8x64xf32>, vector<64x128xf32>, vector<8x128xf32> -> vector<8x128xf32>
    %c0_9 = arith.constant 0 : index
    %c0_10 = arith.constant 0 : index
    %10 = vector.load %arg5[%c0_9, %c0_10] : memref<1x128xf32, #tpu.memory_space<vmem>>, vector<1x128xf32>
    %11 = vector.broadcast %10 : vector<1x128xf32> to vector<8x128xf32>
    %12 = arith.addf %9, %11 : vector<8x128xf32>
    %cst_11 = arith.constant dense<0xFF800000> : vector<8xf32>
    %13 = vector.multi_reduction <maximumf>, %12, %cst_11 [1] : vector<8x128xf32> to vector<8xf32>
    %14 = vector.shape_cast %13 : vector<8xf32> to vector<8x1xf32>
    %15 = vector.broadcast %14 : vector<8x1xf32> to vector<8x128xf32>
    %16 = arith.subf %12, %15 : vector<8x128xf32>
    %17 = math.exp %16 : vector<8x128xf32>
    %cst_12 = arith.constant dense<0.000000e+00> : vector<8xf32>
    %18 = vector.multi_reduction <add>, %17, %cst_12 [1] : vector<8x128xf32> to vector<8xf32>
    %19 = vector.shape_cast %18 : vector<8xf32> to vector<8x1xf32>
    %20 = tpu.reciprocal %19 {approx = true} : vector<8x1xf32> -> vector<8x1xf32>
    %21 = arith.mulf %19, %20 : vector<8x1xf32>
    %cst_13 = arith.constant 2.000000e+00 : f32
    %22 = vector.broadcast %cst_13 : f32 to vector<8x1xf32>
    %23 = arith.subf %22, %21 : vector<8x1xf32>
    %24 = arith.mulf %20, %23 : vector<8x1xf32>
    %25 = vector.broadcast %24 : vector<8x1xf32> to vector<8x128xf32>
    %26 = arith.mulf %17, %25 : vector<8x128xf32>
    %c0_14 = arith.constant 0 : index
    %c0_15 = arith.constant 0 : index
    %27 = vector.load %arg6[%c0_14, %c0_15] : memref<8x128xf32, #tpu.memory_space<vmem>>, vector<8x128xf32>
    tpu.vector_store %arg6[%c0_14, %c0_15], %26 {strides = array<i32>} : memref<8x128xf32, #tpu.memory_space<vmem>>, vector<8x128xf32>,
    return
  }
  func.func @transform_0(%arg0: i32) -> (i32, i32) {
    %c0_i32 = arith.constant 0 : i32
    %c0_i32_0 = arith.constant 0 : i32
    return %arg0, %c0_i32 : i32, i32
  }
  func.func @transform_1(%arg0: i32) -> (i32, i32) {
    %c0_i32 = arith.constant 0 : i32
    %c0_i32_0 = arith.constant 0 : i32
    %c0_i32_1 = arith.constant 0 : i32
    return %c0_i32, %c0_i32_0 : i32, i32
  }
  func.func @transform_2(%arg0: i32) -> (i32, i32) {
    %c0_i32 = arith.constant 0 : i32
    %c0_i32_0 = arith.constant 0 : i32
    %c0_i32_1 = arith.constant 0 : i32
    return %c0_i32, %c0_i32_0 : i32, i32
  }
  func.func @transform_3(%arg0: i32) -> (i32, i32) {
    %c0_i32 = arith.constant 0 : i32
    %c0_i32_0 = arith.constant 0 : i32
    %c0_i32_1 = arith.constant 0 : i32
    return %c0_i32, %c0_i32_0 : i32, i32
  }
  func.func @transform_4(%arg0: i32) -> (i32, i32) {
    %c0_i32 = arith.constant 0 : i32
    %c0_i32_0 = arith.constant 0 : i32
    %c0_i32_1 = arith.constant 0 : i32
    return %c0_i32, %c0_i32_0 : i32, i32
  }
  func.func @transform_5(%arg0: i32) -> (i32, i32) {
    %c0_i32 = arith.constant 0 : i32
    %c0_i32_0 = arith.constant 0 : i32
    return %arg0, %c0_i32 : i32, i32
  }
}

</mosaic_0001>

<llo_original>
// kernel: tpu_custom_call.1
$region0: #{tpu_custom_call.1}
  #allocation0 [shape = 'u32[]', space=smem, size = 0x4, offset = 0x4, fixed_abs, tag = 'smem constant byte address 0x4 - core index']
  #allocation1 [shape = 'u32[144,128]{1,0:T(1,128)}', space=vmem, size = 0x12000, scoped, tag = 'internal scratch']
  %s0 = inlined_call_operand.hbm [shape: f32[8,42], index: 0, kind: input, shape index: {}]
  %s1 = inlined_call_operand.hbm [shape: f32[42,64], index: 1, kind: input, shape index: {}]
  %s2 = inlined_call_operand.vmem [shape: f32[1,64], index: 2, kind: input, shape index: {}]
  %s3 = inlined_call_operand.hbm [shape: f32[64,128], index: 3, kind: input, shape index: {}]
  %s4 = inlined_call_operand.vmem [shape: f32[1,128], index: 4, kind: input, shape index: {}]
  %s5 = inlined_call_operand.hbm [shape: f32[8,128], index: 5, kind: output, shape index: {}]
  %s6 = sld [smem:[#allocation0]]
  $region42: #{tpu_custom_call.1} parent=0
    _
  %s8 = ssub.s32 1, %s6
  %s9 = scalar_select 0, %s8, %s6
  $region1: #{tpu_custom_call.1} parent=0
    #allocation2 [shape = 'u8[4096]{0}', space=vmem, size = 0x1000, scoped, tag = 'input window, operand 0, single buffered']
    #allocation3 [shape = 's32[1]{0}', space=sflag, size = 0x4, scoped, tag = 'scoped memory for tpu_custom_call.1']
    #allocation4 [shape = 's32[1]{0}', space=sflag, size = 0x4, scoped, tag = 'scoped memory for tpu_custom_call.1']
    #allocation5 [shape = 'u8[24576]{0}', space=vmem, size = 0x6000, scoped, tag = 'input window, operand 1, single buffered']
    #allocation6 [shape = 's32[1]{0}', space=sflag, size = 0x4, scoped, tag = 'scoped memory for tpu_custom_call.1']
    #allocation7 [shape = 'u8[32768]{0}', space=vmem, size = 0x8000, scoped, tag = 'input window, operand 3, single buffered']
    #allocation8 [shape = 'u8[4096]{0}', space=vmem, size = 0x1000, scoped, tag = 'output window, operand 0, single buffered']
    %10 = vsyncpa [#allocation3], 0
    %11 = vsyncpa [#allocation6], 0
    %12 = vsyncpa [#allocation4], 0
    // Predicated region
    $region2: #{tpu_custom_call.1} parent=1 // pred_check
      _
    $region3: #{tpu_custom_call.1} parent=1 // pred_check_branch
      %14 = sbr.rel (0) target = $region5
    $region4: #{tpu_custom_call.1} parent=1 // pred_region
      %s16 = ssub.s32 128, 128
      %17 = vsyncadd [#allocation3], %s16
      %s19 = sshll.u32 [#allocation2], 4
      %s20 = int_to_ptr.vmem [resolvable:$true] %s19
      %22 = dma.hbm_to_vmem [thread:$0]  %s0, 128, %s20, [#allocation3]
    $region5: #{tpu_custom_call.1} parent=1 // pred_fallthru
      _
    // Predicated region
    $region6: #{tpu_custom_call.1} parent=1 // pred_check
      _
    $region7: #{tpu_custom_call.1} parent=1 // pred_check_branch
      %24 = sbr.rel (0) target = $region9
    $region8: #{tpu_custom_call.1} parent=1 // pred_region
      %s26 = ssub.s32 768, 768
      %27 = vsyncadd [#allocation6], %s26
      %s28 = sshll.u32 [#allocation5], 4
      %s29 = int_to_ptr.vmem [resolvable:$true] %s28
      %34 = dma.hbm_to_vmem [thread:$0]  %s1, 768, %s29, [#allocation6], 128, 128, 8
    $region9: #{tpu_custom_call.1} parent=1 // pred_fallthru
      _
    // Predicated region
    $region10: #{tpu_custom_call.1} parent=1 // pred_check
      _
    $region11: #{tpu_custom_call.1} parent=1 // pred_check_branch
      %36 = sbr.rel (0) target = $region13
    $region12: #{tpu_custom_call.1} parent=1 // pred_region
      _
    $region13: #{tpu_custom_call.1} parent=1 // pred_fallthru
      _
    // Predicated region
    $region14: #{tpu_custom_call.1} parent=1 // pred_check
      _
    $region15: #{tpu_custom_call.1} parent=1 // pred_check_branch
      %38 = sbr.rel (0) target = $region17
    $region16: #{tpu_custom_call.1} parent=1 // pred_region
      %s40 = ssub.s32 1024, 1024
      %41 = vsyncadd [#allocation6], %s40
      %s42 = sshll.u32 [#allocation7], 4
      %s43 = int_to_ptr.vmem [resolvable:$true] %s42
      %48 = dma.hbm_to_vmem [thread:$0]  %s3, 1024, %s43, [#allocation6], 128, 128, 8
    $region17: #{tpu_custom_call.1} parent=1 // pred_fallthru
      _
    // Predicated region
    $region18: #{tpu_custom_call.1} parent=1 // pred_check
      _
    $region19: #{tpu_custom_call.1} parent=1 // pred_check_branch
      %50 = sbr.rel (0) target = $region21
    $region20: #{tpu_custom_call.1} parent=1 // pred_region
      _
    $region21: #{tpu_custom_call.1} parent=1 // pred_fallthru
      _
    // Predicated region
    $region22: #{tpu_custom_call.1} parent=1 // pred_check
      _
    $region23: #{tpu_custom_call.1} parent=1 // pred_check_branch
      %52 = sbr.rel (0) target = $region25
    $region24: #{tpu_custom_call.1} parent=1 // pred_region
      %53 = dma.done [#allocation3], 128
    $region25: #{tpu_custom_call.1} parent=1 // pred_fallthru
      _
    // Predicated region
    $region26: #{tpu_custom_call.1} parent=1 // pred_check
      _
    $region27: #{tpu_custom_call.1} parent=1 // pred_check_branch
      %55 = sbr.rel (0) target = $region29
    $region28: #{tpu_custom_call.1} parent=1 // pred_region
      %56 = dma.done [#allocation6], 768
    $region29: #{tpu_custom_call.1} parent=1 // pred_fallthru
      _
    // Predicated region
    $region30: #{tpu_custom_call.1} parent=1 // pred_check
      _
    $region31: #{tpu_custom_call.1} parent=1 // pred_check_branch
      %58 = sbr.rel (0) target = $region33
    $region32: #{tpu_custom_call.1} parent=1 // pred_region
      %59 = dma.done [#allocation6], 1024
    $region33: #{tpu_custom_call.1} parent=1 // pred_fallthru
      _
    %v60 = vld [vmem:[#allocation2] sm:$0xff]
    %v61 = vld [vmem:[#allocation5] sm:$0xff]
    %v62 = vld [vmem:[#allocation5 + $0x8] sm:$0xff]
    %v63 = vld [vmem:[#allocation5 + $0x10] sm:$0xff]
    %v64 = vld [vmem:[#allocation5 + $0x18] sm:$0xff]
    %v65 = vld [vmem:[#allocation5 + $0x20] sm:$0xff]
    %v66 = vld [vmem:[#allocation5 + $0x28] sm:$0x3]
    %v67 = vld [vmem:[%s2] sm:$0x1]
    %v69 = vlaneseq
    %v70 = vshrl.u32 %v69, 7
    %v71 = vsub.s32 0, %v70
    %v72 = vrot.slane %v67, %v71
    %vm74 = vcmask 343040
    %v76 = vsel %vm74, %v60, 0
    %vm78 = vcmask 1041408
    %v80 = vsel %vm78, %v66, 0
    %82 = vmatprep.subr.mxu0 0.0
    %83 = vmatpush1.msra.mxu0 0.0
    %84 = vmatprep.subr.mxu0 0.0
    %85 = vmatpush1.msra.mxu0 0.0
    %86 = vmatprep.subr.mxu0 0.0
    %87 = vmatpush1.msra.mxu0 0.0
    %88 = vmatprep.subr.mxu0 0.0
    %89 = vmatpush1.msra.mxu0 0.0
    %90 = vmatprep.subr.mxu0 0.0
    %91 = vmatpush1.msra.mxu0 0.0
    %92 = vmatprep.subr.mxu0 0.0
    %93 = vmatpush1.msra.mxu0 0.0
    %94 = vmatprep.subr.mxu0 0.0
    %95 = vmatpush1.msra.mxu0 0.0
    %96 = vmatprep.subr.mxu0 0.0
    %97 = vmatpush1.msra.mxu0 0.0
    %98 = vmatprep.subr.mxu0 0.0
    %99 = vmatpush1.msra.mxu0 0.0
    %100 = vmatprep.subr.mxu0 0.0
    %101 = vmatpush1.msra.mxu0 0.0
    %102 = vmatprep.subr.mxu0 0.0
    %103 = vmatpush1.msra.mxu0 %v80
    %104 = vmatprep.subr.mxu0 0.0
    %105 = vmatpush1.msra.mxu0 %v65
    %106 = vmatprep.subr.mxu0 0.0
    %107 = vmatpush1.msra.mxu0 %v64
    %108 = vmatprep.subr.mxu0 0.0
    %109 = vmatpush1.msra.mxu0 %v63
    %110 = vmatprep.subr.mxu0 0.0
    %111 = vmatpush1.msra.mxu0 %v62
    %112 = vmatprep.subr.mxu0 0.0
    %113 = vmatpush1.msra.mxu0 %v61
    %114 = vmatprep.subr.mxu0 0.0
    %115 = vmatpush2.msra.mxu0 0.0
    %116 = vmatprep.subr.mxu0 0.0
    %117 = vmatpush2.msra.mxu0 0.0
    %118 = vmatprep.subr.mxu0 0.0
    %119 = vmatpush2.msra.mxu0 0.0
    %120 = vmatprep.subr.mxu0 0.0
    %121 = vmatpush2.msra.mxu0 0.0
    %122 = vmatprep.subr.mxu0 0.0
    %123 = vmatpush2.msra.mxu0 0.0
    %124 = vmatprep.subr.mxu0 0.0
    %125 = vmatpush2.msra.mxu0 0.0
    %126 = vmatprep.subr.mxu0 0.0
    %127 = vmatpush2.msra.mxu0 0.0
    %128 = vmatprep.subr.mxu0 0.0
    %129 = vmatpush2.msra.mxu0 0.0
    %130 = vmatprep.subr.mxu0 0.0
    %131 = vmatpush2.msra.mxu0 0.0
    %132 = vmatprep.subr.mxu0 0.0
    %133 = vmatpush2.msra.mxu0 0.0
    %134 = vmatprep.subr.mxu0 0.0
    %135 = vmatpush2.msra.mxu0 0.0
    %136 = vmatprep.subr.mxu0 0.0
    %137 = vmatpush2.msra.mxu0 0.0
    %138 = vmatprep.subr.mxu0 0.0
    %139 = vmatpush2.msra.mxu0 0.0
    %140 = vmatprep.subr.mxu0 0.0
    %141 = vmatpush2.msra.mxu0 0.0
    %142 = vmatprep.subr.mxu0 0.0
    %143 = vmatpush2.msra.mxu0 0.0
    %144 = vmatprep.subr.mxu0 0.0
    %145 = vmatpush2.msra.mxu0 0.0
    %146 = vmatprep.mubr.f32.mxu0 0.0
    %147 = vmatmul.mubr.f32.gmra.mxu0 %v76
    %v148 = vpop.f32.mrf.mxu0
    %v149 = vadd.f32 %v72, %v148
    %v150 = vpop.f32.mrf.mxu0
    %151 = vdwg.mxu0
    %v152 = vmax.f32 %v149, 0.0
    %v153 = vld [vmem:[#allocation7] sm:$0xff]
    %v154 = vld [vmem:[#allocation7 + $0x8] sm:$0xff]
    %v155 = vld [vmem:[#allocation7 + $0x10] sm:$0xff]
    %v156 = vld [vmem:[#allocation7 + $0x18] sm:$0xff]
    %v157 = vld [vmem:[#allocation7 + $0x20] sm:$0xff]
    %v158 = vld [vmem:[#allocation7 + $0x28] sm:$0xff]
    %v159 = vld [vmem:[#allocation7 + $0x30] sm:$0xff]
    %v160 = vld [vmem:[#allocation7 + $0x38] sm:$0xff]
    %v161 = vld [vmem:[%s4] sm:$0x1]
    %v163 = vlaneseq
    %v164 = vshrl.u32 %v163, 7
    %v165 = vsub.s32 0, %v164
    %v166 = vrot.slane %v161, %v165
    %vm168 = vcmask 523264
    %v170 = vsel %vm168, %v152, 0
    %172 = vmatprep.subr.mxu0 0.0
    %173 = vmatpush1.msra.mxu0 0.0
    %174 = vmatprep.subr.mxu0 0.0
    %175 = vmatpush1.msra.mxu0 0.0
    %176 = vmatprep.subr.mxu0 0.0
    %177 = vmatpush1.msra.mxu0 0.0
    %178 = vmatprep.subr.mxu0 0.0
    %179 = vmatpush1.msra.mxu0 0.0
    %180 = vmatprep.subr.mxu0 0.0
    %181 = vmatpush1.msra.mxu0 0.0
    %182 = vmatprep.subr.mxu0 0.0
    %183 = vmatpush1.msra.mxu0 0.0
    %184 = vmatprep.subr.mxu0 0.0
    %185 = vmatpush1.msra.mxu0 0.0
    %186 = vmatprep.subr.mxu0 0.0
    %187 = vmatpush1.msra.mxu0 0.0
    %188 = vmatprep.subr.mxu0 0.0
    %189 = vmatpush1.msra.mxu0 %v160
    %190 = vmatprep.subr.mxu0 0.0
    %191 = vmatpush1.msra.mxu0 %v159
    %192 = vmatprep.subr.mxu0 0.0
    %193 = vmatpush1.msra.mxu0 %v158
    %194 = vmatprep.subr.mxu0 0.0
    %195 = vmatpush1.msra.mxu0 %v157
    %196 = vmatprep.subr.mxu0 0.0
    %197 = vmatpush1.msra.mxu0 %v156
    %198 = vmatprep.subr.mxu0 0.0
    %199 = vmatpush1.msra.mxu0 %v155
    %200 = vmatprep.subr.mxu0 0.0
    %201 = vmatpush1.msra.mxu0 %v154
    %202 = vmatprep.subr.mxu0 0.0
    %203 = vmatpush1.msra.mxu0 %v153
    %204 = vmatprep.subr.mxu0 0.0
    %205 = vmatpush2.msra.mxu0 0.0
    %206 = vmatprep.subr.mxu0 0.0
    %207 = vmatpush2.msra.mxu0 0.0
    %208 = vmatprep.subr.mxu0 0.0
    %209 = vmatpush2.msra.mxu0 0.0
    %210 = vmatprep.subr.mxu0 0.0
    %211 = vmatpush2.msra.mxu0 0.0
    %212 = vmatprep.subr.mxu0 0.0
    %213 = vmatpush2.msra.mxu0 0.0
    %214 = vmatprep.subr.mxu0 0.0
    %215 = vmatpush2.msra.mxu0 0.0
    %216 = vmatprep.subr.mxu0 0.0
    %217 = vmatpush2.msra.mxu0 0.0
    %218 = vmatprep.subr.mxu0 0.0
    %219 = vmatpush2.msra.mxu0 0.0
    %220 = vmatprep.subr.mxu0 0.0
    %221 = vmatpush2.msra.mxu0 0.0
    %222 = vmatprep.subr.mxu0 0.0
    %223 = vmatpush2.msra.mxu0 0.0
    %224 = vmatprep.subr.mxu0 0.0
    %225 = vmatpush2.msra.mxu0 0.0
    %226 = vmatprep.subr.mxu0 0.0
    %227 = vmatpush2.msra.mxu0 0.0
    %228 = vmatprep.subr.mxu0 0.0
    %229 = vmatpush2.msra.mxu0 0.0
    %230 = vmatprep.subr.mxu0 0.0
    %231 = vmatpush2.msra.mxu0 0.0
    %232 = vmatprep.subr.mxu0 0.0
    %233 = vmatpush2.msra.mxu0 0.0
    %234 = vmatprep.subr.mxu0 0.0
    %235 = vmatpush2.msra.mxu0 0.0
    %236 = vmatprep.mubr.f32.mxu0 0.0
    %237 = vmatmul.mubr.f32.gmra.mxu0 %v170
    %v238 = vpop.f32.mrf.mxu0
    %v239 = vadd.f32 %v166, %v238
    %v240 = vpop.f32.mrf.mxu0
    %241 = vdwg.mxu0
    %242 = vmax.xlane.f32.xlu0 %v239
    %v243 = vpop.xlane.xlu0 %242
    %v244 = vsub.f32 %v239, %v243
    %v245 = vmul.f32 %v244, 1.442695
    %v246 = vpow.pop %v245
    %247 = vadd.xlane.f32.xlu0 %v246
    %v248 = vpop.xlane.xlu0 %247
    %v249 = vrcp.pop %v248
    %v250 = vmul.f32 %v248, %v249
    %v251 = vsub.f32 2.0, %v250
    %v252 = vmul.f32 %v249, %v251
    %v253 = vmul.f32 %v246, %v252
    %254 = vst [vmem:[#allocation8] sm:$0xff] %v253
    // Predicated region
    $region34: #{tpu_custom_call.1} parent=1 // pred_check
      _
    $region35: #{tpu_custom_call.1} parent=1 // pred_check_branch
      %256 = sbr.rel (0) target = $region37
    $region36: #{tpu_custom_call.1} parent=1 // pred_region
      %s258 = ssub.s32 128, 128
      %259 = vsyncadd [#allocation4], %s258
      %s261 = sshll.u32 [#allocation8], 4
      %s262 = int_to_ptr.vmem [resolvable:$true] %s261
      %264 = dma.vmem_to_hbm [thread:$0]  %s262, 128, %s5, [#allocation4]
    $region37: #{tpu_custom_call.1} parent=1 // pred_fallthru
      _
    // Predicated region
    $region38: #{tpu_custom_call.1} parent=1 // pred_check
      _
    $region39: #{tpu_custom_call.1} parent=1 // pred_check_branch
      %266 = sbr.rel (0) target = $region41
    $region40: #{tpu_custom_call.1} parent=1 // pred_region
      %267 = dma.done [#allocation4], 128
    $region41: #{tpu_custom_call.1} parent=1 // pred_fallthru
      _
    %268 = vsyncpa [#allocation3], 1
    %269 = vsyncpa [#allocation6], 1
    %270 = vsyncpa [#allocation4], 1

</llo_original>
